<compile_context>
chip_gen: v5e
topology: v5e:2x2
jax: 0.10.0
libtpu: 0.0.40
codegen_flags: <defaults>
</compile_context>

<pallas_src>
import jax
import jax.numpy as jnp
from jax import lax
from jax.experimental import pallas as pl
from jax.experimental.pallas import tpu as pltpu


_INV_SQRT2 = 0.7071067811865476


# ----------------------------------------------------------------------------
# Small helpers
# ----------------------------------------------------------------------------
def _vmem_capacity_bytes():
    """Physical VMEM per core; conservative 64 MiB fallback (v7x)."""
    try:
        cap = getattr(pltpu.get_tpu_info(), "vmem_capacity_bytes", None)
        if cap:
            return int(cap)
    except Exception:
        pass
    return 64 << 20


def _likely_multi_tensorcore():
    """True for chips with >1 TensorCore per device (v7x, v4/v5p megacore)."""
    try:
        kind = jax.devices()[0].device_kind.lower()
    except Exception:
        return False
    return any(tag in kind for tag in ("v7", "7x", "v4", "v5p"))


def _vmem_limit(request_bytes, vmem_cap):
    return int(min(max(request_bytes, 16 << 20), vmem_cap - (8 << 20)))


def _gelu_f32(h):
    # exact / erf form, matching nn.GELU default
    return 0.5 * h * (1.0 + lax.erf(h * _INV_SQRT2))


def _hardsigmoid_f32(s):
    return jnp.clip(s * (1.0 / 6.0) + 0.5, 0.0, 1.0)


# ----------------------------------------------------------------------------
# Fused single-pass kernel: whole (C, HW) slab per batch element in VMEM.
# 2 slab passes of HBM traffic (read + write). grid=(N,) parallel.
# ----------------------------------------------------------------------------
def _se_fused(x, w1t, w2, vmem_cap, donate_x):
    N, C, HW = x.shape
    E = w1t.shape[1]
    inv_hw = 1.0 / float(HW)

    def kernel(x_ref, w1t_ref, w2_ref, o_ref):
        xv = x_ref[0]                                                       # (C, HW)
        pooled = jnp.sum(xv, axis=-1, keepdims=True,
                         dtype=jnp.float32) * inv_hw                       # (C, 1) f32
        # TODO(synk): for very large C*E (late MobileNet layers) move this tiny
        # MLP onto the MXU; here it stays on the VPU (broadcast-mul + reduce).
        h = jnp.sum(w1t_ref[...].astype(jnp.float32) * pooled,
                    axis=0, keepdims=True)                                  # (1, E)
        h = _gelu_f32(h)
        s = jnp.sum(w2_ref[...].astype(jnp.float32) * h,
                    axis=-1, keepdims=True)                                 # (C, 1)
        s = _hardsigmoid_f32(s)
        o_ref[0] = (xv * s.astype(xv.dtype)).astype(o_ref.dtype)

    slab_bytes = C * HW * x.dtype.itemsize
    vmem_limit = _vmem_limit(4 * slab_bytes + (4 << 20), vmem_cap)

    return pl.pallas_call(
        kernel,
        out_shape=jax.ShapeDtypeStruct((N, C, HW), x.dtype),
        grid_spec=pltpu.PrefetchScalarGridSpec(
            num_scalar_prefetch=0,
            grid=(N,),
            in_specs=[
                pl.BlockSpec((1, C, HW), lambda n: (n, 0, 0)),
                pl.BlockSpec((C, E), lambda n: (0, 0)),
                pl.BlockSpec((C, E), lambda n: (0, 0)),
            ],
            out_specs=pl.BlockSpec((1, C, HW), lambda n: (n, 0, 0)),
        ),
        compiler_params=pltpu.CompilerParams(
            dimension_semantics=("parallel",),
            vmem_limit_bytes=vmem_limit,
        ),
        input_output_aliases=({0: 0} if donate_x else {}),
    )(x, w1t, w2)


# ----------------------------------------------------------------------------
# Row-flattened tiled path: x viewed as (N*C, HW).
#   pass 1: per-row pooled sums over HW tiles (rows parallel, HW arbitrary)
#   micro : tiny C->E->C MLP on the pooled (N, C) tensor
#   pass 2: apply per-row scale (both axes parallel)
# ----------------------------------------------------------------------------
def _se_tiled(x, w1t, w2, vmem_cap, tile_budget_bytes, donate_x):
    N, C, HW = x.shape
    E = w1t.shape[1]
    rows = N * C
    itemsize = x.dtype.itemsize
    inv_hw = 1.0 / float(HW)

    x2 = x.reshape(rows, HW)                    # zero-copy; HW stays lane-dense

    if tile_budget_bytes is None:
        # ~4 MiB tiles on 128 MiB parts (v5e/v6e), ~2 MiB on v7x (64 MiB VMEM).
        tile_budget_bytes = (4 << 20) if vmem_cap >= (96 << 20) else (2 << 20)
    row_align = max(8, 32 // itemsize)          # 8 f32 / 16 bf16 / 32 int8 sublanes
    hw_padded = -(-HW // 128) * 128

    if row_align * HW * itemsize <= tile_budget_bytes:
        # Full HW per tile (no partial-lane masking needed), many rows per tile.
        hw_tile = HW
        rt = max(row_align,
                 (tile_budget_bytes // (HW * itemsize)) // row_align * row_align)
        if rt > rows:
            rt = rows
    else:
        # Huge feature maps: minimal row tile, lane axis a multiple of 128.
        rt = min(row_align, rows)
        hw_tile = max(128, (tile_budget_bytes // (rt * itemsize)) // 128 * 128)
        hw_tile = min(hw_tile, hw_padded)

    n_r = -(-rows // rt)
    n_hw = -(-HW // hw_tile)
    needs_mask = (HW % hw_tile) != 0
    tile_bytes = rt * hw_tile * itemsize

    # ---- pass 1: pooled per-row sums (accumulated in the resident output) ----
    def pool_kernel(x_ref, sum_ref):
        t = pl.program_id(1)

        @pl.when(t == 0)
        def _():
            sum_ref[...] = jnp.zeros_like(sum_ref)

        if not needs_mask:
            sum_ref[...] += jnp.sum(x_ref[...], axis=-1, keepdims=True,
                                    dtype=jnp.float32)
        else:
            last = pl.num_programs(1) - 1

            @pl.when(t != last)
            def _():
                sum_ref[...] += jnp.sum(x_ref[...], axis=-1, keepdims=True,
                                        dtype=jnp.float32)

            @pl.when(t == last)
            def _():
                xv = x_ref[...]
                lane = lax.broadcasted_iota(jnp.int32, xv.shape, 1) + t * hw_tile
                xm = jnp.where(lane < HW, xv.astype(jnp.float32), 0.0)
                sum_ref[...] += jnp.sum(xm, axis=-1, keepdims=True)

    pooled_sum = pl.pallas_call(
        pool_kernel,
        out_shape=jax.ShapeDtypeStruct((rows, 1), jnp.float32),
        grid_spec=pltpu.PrefetchScalarGridSpec(
            num_scalar_prefetch=0,
            grid=(n_r, n_hw),
            in_specs=[pl.BlockSpec((rt, hw_tile), lambda r, t: (r, t))],
            # NOTE: HW must stay the last (innermost / "arbitrary") grid axis for
            # this resident-output accumulation to be correct.
            out_specs=pl.BlockSpec((rt, 1), lambda r, t: (r, 0)),
        ),
        compiler_params=pltpu.CompilerParams(
            dimension_semantics=("parallel", "arbitrary"),
            vmem_limit_bytes=_vmem_limit(2 * tile_bytes + (2 << 20), vmem_cap),
        ),
    )(x2)

    # ---- tiny MLP micro-kernel on the pooled (N, C) tensor ----
    def mlp_kernel(p_ref, w1t_ref, w2_ref, s_ref):
        pooled = p_ref[...] * inv_hw                                        # (N, C) f32
        w1tv = w1t_ref[...].astype(jnp.float32)                             # (C, E)
        w2v = w2_ref[...].astype(jnp.float32)                               # (C, E)
        h = jnp.sum(pooled[:, :, None] * w1tv[None, :, :], axis=1)          # (N, E)
        h = _gelu_f32(h)
        s = jnp.sum(h[:, None, :] * w2v[None, :, :], axis=-1)               # (N, C)
        s_ref[...] = _hardsigmoid_f32(s)

    scale_nc = pl.pallas_call(
        mlp_kernel,
        out_shape=jax.ShapeDtypeStruct((N, C), jnp.float32),
    )(pooled_sum.reshape(N, C), w1t, w2)

    scale = scale_nc.reshape(rows, 1)

    # ---- pass 2: apply per-row scale (fully parallel, lane-dense stores) ----
    def apply_kernel(x_ref, s_ref, o_ref):
        o_ref[...] = (x_ref[...] * s_ref[...].astype(x_ref.dtype)).astype(o_ref.dtype)

    out2 = pl.pallas_call(
        apply_kernel,
        out_shape=jax.ShapeDtypeStruct((rows, HW), x.dtype),
        grid_spec=pltpu.PrefetchScalarGridSpec(
            num_scalar_prefetch=0,
            grid=(n_r, n_hw),
            in_specs=[
                pl.BlockSpec((rt, hw_tile), lambda r, t: (r, t)),
                pl.BlockSpec((rt, 1), lambda r, t: (r, 0)),
            ],
            out_specs=pl.BlockSpec((rt, hw_tile), lambda r, t: (r, t)),
        ),
        compiler_params=pltpu.CompilerParams(
            dimension_semantics=("parallel", "parallel"),
            vmem_limit_bytes=_vmem_limit(4 * tile_bytes + (2 << 20), vmem_cap),
        ),
        input_output_aliases=({0: 0} if donate_x else {}),
    )(x2, scale)

    return out2.reshape(N, C, HW)


# ----------------------------------------------------------------------------
# Public wrapper: x (N,C,H,W) NCHW, w1 (E,C) conv1 weight, w2 (C,E) conv2 weight.
# ----------------------------------------------------------------------------
def se_module(x_nchw, w1, w2, *, force_tiled=False, fused_slab_limit=None,
              tile_budget_bytes=None, donate_x=False):
    N, C, H, W = x_nchw.shape
    HW = H * W
    x = x_nchw.reshape(N, C, HW)           # zero-copy: NCHW kept, HW on lane axis
    w1t = jnp.transpose(w1)                # (C, E) -- tiny
    vmem_cap = _vmem_capacity_bytes()
    slab_bytes = C * HW * x.dtype.itemsize

    if fused_slab_limit is None:
        # 4x slab (in+out double-buffered) + headroom must fit VMEM:
        # ~28 MiB on 128 MiB parts (v5e/v6e), ~12 MiB on v7x (64 MiB).
        fused_slab_limit = min(max((vmem_cap - (16 << 20)) // 4, 4 << 20), 28 << 20)

    # Fused path: 2 slab passes of HBM traffic, but only one grid point per batch
    # element -- use it when the slab fits and there is batch parallelism (or the
    # chip has a single TensorCore). Otherwise the row-parallel tiled path keeps
    # both v7x TensorCores busy even at N==1.
    use_fused = (not force_tiled
                 and slab_bytes <= fused_slab_limit
                 and (N >= 2 or not _likely_multi_tensorcore()))

    # TODO(synk): late-stage layers (large C, HW < 128) would benefit from a
    # channel-major (HW, C) layout for lane-dense stores; requires the caller to
    # absorb the transpose, so not done here.
    if use_fused:
        out = _se_fused(x, w1t, w2, vmem_cap, donate_x)
    else:
        out = _se_tiled(x, w1t, w2, vmem_cap, tile_budget_bytes, donate_x)
    return out.reshape(N, C, H, W)


def _reference(x_nchw, w1, w2):
    # Pure-JAX reference with identical semantics (NCHW).
    pooled = jnp.mean(x_nchw.astype(jnp.float32), axis=(2, 3))              # (N, C)
    h = pooled @ w1.T.astype(jnp.float32)                                   # (N, E)
    h = 0.5 * h * (1.0 + lax.erf(h / jnp.sqrt(2.0)))
    s = h @ w2.T.astype(jnp.float32)                                        # (N, C)
    s = jnp.clip(s / 6.0 + 0.5, 0.0, 1.0)
    return (x_nchw.astype(jnp.float32) * s[:, :, None, None]).astype(x_nchw.dtype)


if __name__ == "__main__":
    # Shapes consistent with the module: in_size=4 -> expand_size=max(4//4, 8)=8
    N, C, H, W = 2, 4, 16, 16
    reduction = 4
    E = max(C // reduction, 8)

    key = jax.random.PRNGKey(0)
    kx, k1, k2 = jax.random.split(key, 3)
    x = jax.random.normal(kx, (N, C, H, W), dtype=jnp.float32)
    # Conv2d weights (out, in, 1, 1) squeezed to (out, in); deterministic init.
    w1 = jax.random.normal(k1, (E, C), dtype=jnp.float32) * 0.1
    w2 = jax.random.normal(k2, (C, E), dtype=jnp.float32) * 0.1

    ref = _reference(x, w1, w2)

    # Fused single-pass path (default: small slab, N >= 2).
    out = se_module(x, w1, w2)
    jax.block_until_ready(out)
    assert out.shape == x.shape and out.dtype == x.dtype
    assert jnp.allclose(out, ref, rtol=1e-5, atol=1e-5)

    # Row-parallel tiled path (pool -> tiny MLP -> apply), forced.
    out_tiled = se_module(x, w1, w2, force_tiled=True)
    jax.block_until_ready(out_tiled)
    assert jnp.allclose(out_tiled, ref, rtol=1e-5, atol=1e-5)

    # Ragged-HW tiled path: N=1, HW=200 (not a multiple of 128) with a tiny tile
    # budget -> exercises masked last-tile accumulation + row-parallel grid.
    N2, C2, H2, W2 = 1, 8, 10, 20
    E2 = max(C2 // reduction, 8)
    x2 = jax.random.normal(kx, (N2, C2, H2, W2), dtype=jnp.float32)
    w1b = jax.random.normal(k1, (E2, C2), dtype=jnp.float32) * 0.1
    w2b = jax.random.normal(k2, (C2, E2), dtype=jnp.float32) * 0.1
    ref2 = _reference(x2, w1b, w2b)
    out2 = se_module(x2, w1b, w2b, force_tiled=True, tile_budget_bytes=4096)
    jax.block_until_ready(out2)
    assert jnp.allclose(out2, ref2, rtol=1e-5, atol=1e-5)

    print("KERNEL_OK")
</pallas_src>

<mosaic_0001>
module attributes {stable_mosaic.version = 11 : i64} {
  func.func @kernel(%arg0: i32, %arg1: memref<1x4x256xf32, #tpu.memory_space<vmem>>, %arg2: memref<4x8xf32, #tpu.memory_space<vmem>>, %arg3: memref<4x8xf32, #tpu.memory_space<vmem>>, %arg4: memref<1x4x256xf32, #tpu.memory_space<vmem>>) attributes {dimension_semantics = [#tpu.dimension_semantics<parallel>], iteration_bounds = array<i64: 2>, scalar_prefetch = 0 : i64, scratch_operands = 0 : i64, tpu.core_type = #tpu.core_type<tc>, window_params = [{transform_indices = @transform_0, window_bounds = array<i64: 1, 4, 256>}, {pipeline_mode = #tpu.pipeline_mode<synchronous>, transform_indices = @transform_1, window_bounds = array<i64: 4, 8>}, {pipeline_mode = #tpu.pipeline_mode<synchronous>, transform_indices = @transform_2, window_bounds = array<i64: 4, 8>}, {transform_indices = @transform_3, window_bounds = array<i64: 1, 4, 256>}]} {
    %c0 = arith.constant 0 : index
    %c0_0 = arith.constant 0 : index
    %c0_1 = arith.constant 0 : index
    %0 = vector.load %arg1[%c0, %c0_0, %c0_1] : memref<1x4x256xf32, #tpu.memory_space<vmem>>, vector<1x4x256xf32>
    %1 = vector.shape_cast %0 : vector<1x4x256xf32> to vector<4x256xf32>
    %cst = arith.constant dense<0.000000e+00> : vector<4xf32>
    %2 = vector.multi_reduction <add>, %1, %cst [1] : vector<4x256xf32> to vector<4xf32>
    %3 = vector.shape_cast %2 : vector<4xf32> to vector<4x1xf32>
    %cst_2 = arith.constant 3.906250e-03 : f32
    %4 = vector.broadcast %cst_2 : f32 to vector<4x1xf32>
    %5 = arith.mulf %3, %4 : vector<4x1xf32>
    %c0_3 = arith.constant 0 : index
    %c0_4 = arith.constant 0 : index
    %6 = vector.load %arg2[%c0_3, %c0_4] : memref<4x8xf32, #tpu.memory_space<vmem>>, vector<4x8xf32>
    %7 = vector.broadcast %5 : vector<4x1xf32> to vector<4x8xf32>
    %8 = arith.mulf %6, %7 : vector<4x8xf32>
    %cst_5 = arith.constant dense<0.000000e+00> : vector<8xf32>
    %9 = vector.multi_reduction <add>, %8, %cst_5 [0] : vector<4x8xf32> to vector<8xf32>
    %10 = vector.shape_cast %9 : vector<8xf32> to vector<1x8xf32>
    %cst_6 = arith.constant 5.000000e-01 : f32
    %11 = vector.broadcast %cst_6 : f32 to vector<1x8xf32>
    %12 = arith.mulf %11, %10 : vector<1x8xf32>
    %cst_7 = arith.constant 0.707106769 : f32
    %13 = vector.broadcast %cst_7 : f32 to vector<1x8xf32>
    %14 = arith.mulf %10, %13 : vector<1x8xf32>
    %15 = math.erf %14 : vector<1x8xf32>
    %cst_8 = arith.constant 1.000000e+00 : f32
    %16 = vector.broadcast %cst_8 : f32 to vector<1x8xf32>
    %17 = arith.addf %16, %15 : vector<1x8xf32>
    %18 = arith.mulf %12, %17 : vector<1x8xf32>
    %c0_9 = arith.constant 0 : index
    %c0_10 = arith.constant 0 : index
    %19 = vector.load %arg3[%c0_9, %c0_10] : memref<4x8xf32, #tpu.memory_space<vmem>>, vector<4x8xf32>
    %20 = vector.broadcast %18 : vector<1x8xf32> to vector<4x8xf32>
    %21 = arith.mulf %19, %20 : vector<4x8xf32>
    %cst_11 = arith.constant dense<0.000000e+00> : vector<4xf32>
    %22 = vector.multi_reduction <add>, %21, %cst_11 [1] : vector<4x8xf32> to vector<4xf32>
    %23 = vector.shape_cast %22 : vector<4xf32> to vector<4x1xf32>
    %cst_12 = arith.constant 0.166666672 : f32
    %24 = vector.broadcast %cst_12 : f32 to vector<4x1xf32>
    %25 = arith.mulf %23, %24 : vector<4x1xf32>
    %cst_13 = arith.constant 5.000000e-01 : f32
    %26 = vector.broadcast %cst_13 : f32 to vector<4x1xf32>
    %27 = arith.addf %25, %26 : vector<4x1xf32>
    %cst_14 = arith.constant 0.000000e+00 : f32
    %cst_15 = arith.constant 1.000000e+00 : f32
    %28 = vector.broadcast %cst_14 : f32 to vector<4x1xf32>
    %29 = arith.maximumf %28, %27 : vector<4x1xf32>
    %30 = vector.broadcast %cst_15 : f32 to vector<4x1xf32>
    %31 = arith.minimumf %30, %29 : vector<4x1xf32>
    %32 = vector.broadcast %31 : vector<4x1xf32> to vector<4x256xf32>
    %33 = arith.mulf %1, %32 : vector<4x256xf32>
    %c0_16 = arith.constant 0 : index
    %c0_17 = arith.constant 0 : index
    %c0_18 = arith.constant 0 : index
    %34 = vector.load %arg4[%c0_16, %c0_17, %c0_18] : memref<1x4x256xf32, #tpu.memory_space<vmem>>, vector<1x4x256xf32>
    %35 = vector.shape_cast %34 : vector<1x4x256xf32> to vector<4x256xf32>
    %36 = vector.shape_cast %33 : vector<4x256xf32> to vector<1x4x256xf32>
    tpu.vector_store %arg4[%c0_16, %c0_17, %c0_18], %36 {strides = array<i32>} : memref<1x4x256xf32, #tpu.memory_space<vmem>>, vector<1x4x256xf32>,
    return
  }
  func.func @transform_0(%arg0: i32) -> (i32, i32, i32) {
    %c0_i32 = arith.constant 0 : i32
    %c0_i32_0 = arith.constant 0 : i32
    %c0_i32_1 = arith.constant 0 : i32
    return %arg0, %c0_i32, %c0_i32_0 : i32, i32, i32
  }
  func.func @transform_1(%arg0: i32) -> (i32, i32) {
    %c0_i32 = arith.constant 0 : i32
    %c0_i32_0 = arith.constant 0 : i32
    %c0_i32_1 = arith.constant 0 : i32
    return %c0_i32, %c0_i32_0 : i32, i32
  }
  func.func @transform_2(%arg0: i32) -> (i32, i32) {
    %c0_i32 = arith.constant 0 : i32
    %c0_i32_0 = arith.constant 0 : i32
    %c0_i32_1 = arith.constant 0 : i32
    return %c0_i32, %c0_i32_0 : i32, i32
  }
  func.func @transform_3(%arg0: i32) -> (i32, i32, i32) {
    %c0_i32 = arith.constant 0 : i32
    %c0_i32_0 = arith.constant 0 : i32
    %c0_i32_1 = arith.constant 0 : i32
    return %arg0, %c0_i32, %c0_i32_0 : i32, i32, i32
  }
}

</mosaic_0001>

<llo_original>
// kernel: tpu_custom_call.1
$region0: #{tpu_custom_call.1}
  #allocation0 [shape = 'u32[]', space=smem, size = 0x4, offset = 0x4, fixed_abs, tag = 'smem constant byte address 0x4 - core index']
  #allocation1 [shape = 'u32[72,128]{1,0:T(1,128)}', space=vmem, size = 0x9000, scoped, tag = 'internal scratch']
  %s0 = inlined_call_operand.hbm [shape: f32[2,4,256], index: 0, kind: input, shape index: {}]
  %s1 = inlined_call_operand.hbm [shape: f32[4,8], index: 1, kind: input, shape index: {}]
  %s2 = inlined_call_operand.hbm [shape: f32[4,8], index: 2, kind: input, shape index: {}]
  %s3 = inlined_call_operand.hbm [shape: f32[2,4,256], index: 3, kind: output, shape index: {}]
  %s4 = sld [smem:[#allocation0]]
  $region57: #{tpu_custom_call.1} parent=0
    _
  %s6 = ssub.s32 1, %s4
  %s7 = scalar_select 0, %s6, %s4
  $region1: #{tpu_custom_call.1} parent=0
    #allocation2 [shape = 'u8[8192]{0}', space=vmem, size = 0x2000, scoped, tag = 'input window, operand 0']
    #allocation3 [shape = 's32[2]{0}', space=sflag, size = 0x8, scoped, tag = 'scoped memory for tpu_custom_call.1']
    #allocation4 [shape = 's32[2]{0}', space=sflag, size = 0x8, scoped, tag = 'scoped memory for tpu_custom_call.1']
    #allocation5 [shape = 'u8[2048]{0}', space=vmem, size = 0x800, scoped, tag = 'input window, operand 1, single buffered']
    #allocation6 [shape = 's32[1]{0}', space=sflag, size = 0x4, scoped, tag = 'scoped memory for tpu_custom_call.1']
    #allocation7 [shape = 'u8[2048]{0}', space=vmem, size = 0x800, scoped, tag = 'input window, operand 2, single buffered']
    #allocation8 [shape = 'u8[8192]{0}', space=vmem, size = 0x2000, scoped, tag = 'output window, operand 0']
    %8 = vsyncpa [#allocation3], 0
    %s9 = scalar_lea.sflag [#allocation3], 1
    %10 = vsyncpa %s9, 0
    %11 = vsyncpa [#allocation6], 0
    %12 = vsyncpa [#allocation4], 0
    %s13 = scalar_lea.sflag [#allocation4], 1
    %14 = vsyncpa %s13, 0
    loop: start=0, step=1, limit=4
    $region2: #{tpu_custom_call.1} parent=1 // loop_pre_header
      _
    $region3: #{tpu_custom_call.1} parent=1 // loop_header
      %s16 = sphi 0, %s20
      %p17 = scmp.ge.s32.totalorder %s16, 4
      %s26 = sphi 0, %s28
      %s29 = sphi 0, %s26
      %s30 = sphi 0, %s29
      %s46 = sphi 0, %s30
      %s50 = sphi 0, %s50
      %s52 = sphi 0, %s50
      %s53 = sphi 0, %s52
      %s67 = sphi 0, %s53
      %s71 = sphi 0, %s71
      %s73 = sphi 0, %s71
      %s74 = sphi 0, %s73
      %s88 = sphi 0, %s74
      %s94 = sphi 0, %s96
      %s97 = sphi 0, %s94
      %s98 = sphi 0, %s97
      %s114 = sphi 0, %s98
    $region4: #{tpu_custom_call.1} parent=1 // loop_header_branch
      %19 = sbr.rel (%p17) target = $region8
    $region5: #{tpu_custom_call.1} parent=1 // loop_body
      %s21 = ssub.s32 %s16, 1
      %s22 = ssub.s32 %s16, 2
      %s23 = sadd.s32 %s16, 1
      %s24 = ssub.s32 %s16, %s23
      %p25 = scmp.eq.s32.totalorder %s24, 0
      %s27 = sadd.s32 %s26, 1
      %s28 = scalar_select %p25, %s26, %s27
      %p31 = pneg %p25
      %p32 = scmp.eq.s32.totalorder %s16, 1
      %p33 = por %p31, %p32
      %p34 = scmp.ne.s32.totalorder %s26, %s29
      %p35 = scmp.eq.s32.totalorder %s16, 0
      %p36 = por %p34, %p35
      %p37 = scmp.ne.s32.totalorder %s26, %s29
      %p38 = scmp.eq.s32.totalorder %s21, 1
      %p39 = por %p37, %p38
      %p40 = scmp.ne.s32.totalorder %s29, %s30
      %p41 = scmp.eq.s32.totalorder %s21, 0
      %p42 = por %p40, %p41
      %p43 = scmp.ne.s32.totalorder %s29, %s30
      %p44 = scmp.eq.s32.totalorder %s22, 1
      %p45 = por %p43, %p44
      %p47 = scmp.ne.s32.totalorder %s30, %s46
      %p48 = scmp.eq.s32.totalorder %s22, 0
      %p49 = por %p47, %p48
      %s51 = sadd.s32 %s50, 1
      %p54 = scmp.eq.s32.totalorder %s16, 1
      %p55 = scmp.ne.s32.totalorder %s50, %s52
      %p56 = scmp.eq.s32.totalorder %s16, 0
      %p57 = por %p55, %p56
      %p58 = scmp.ne.s32.totalorder %s50, %s52
      %p59 = scmp.eq.s32.totalorder %s21, 1
      %p60 = por %p58, %p59
      %p61 = scmp.ne.s32.totalorder %s52, %s53
      %p62 = scmp.eq.s32.totalorder %s21, 0
      %p63 = por %p61, %p62
      %p64 = scmp.ne.s32.totalorder %s52, %s53
      %p65 = scmp.eq.s32.totalorder %s22, 1
      %p66 = por %p64, %p65
      %p68 = scmp.ne.s32.totalorder %s53, %s67
      %p69 = scmp.eq.s32.totalorder %s22, 0
      %p70 = por %p68, %p69
      %s72 = sadd.s32 %s71, 1
      %p75 = scmp.eq.s32.totalorder %s16, 1
      %p76 = scmp.ne.s32.totalorder %s71, %s73
      %p77 = scmp.eq.s32.totalorder %s16, 0
      %p78 = por %p76, %p77
      %p79 = scmp.ne.s32.totalorder %s71, %s73
      %p80 = scmp.eq.s32.totalorder %s21, 1
      %p81 = por %p79, %p80
      %p82 = scmp.ne.s32.totalorder %s73, %s74
      %p83 = scmp.eq.s32.totalorder %s21, 0
      %p84 = por %p82, %p83
      %p85 = scmp.ne.s32.totalorder %s73, %s74
      %p86 = scmp.eq.s32.totalorder %s22, 1
      %p87 = por %p85, %p86
      %p89 = scmp.ne.s32.totalorder %s74, %s88
      %p90 = scmp.eq.s32.totalorder %s22, 0
      %p91 = por %p89, %p90
      %s92 = ssub.s32 %s16, %s23
      %p93 = scmp.eq.s32.totalorder %s92, 0
      %s95 = sadd.s32 %s94, 1
      %s96 = scalar_select %p93, %s94, %s95
      %p99 = pneg %p93
      %p100 = scmp.eq.s32.totalorder %s16, 1
      %p101 = por %p99, %p100
      %p102 = scmp.ne.s32.totalorder %s94, %s97
      %p103 = scmp.eq.s32.totalorder %s16, 0
      %p104 = por %p102, %p103
      %p105 = scmp.ne.s32.totalorder %s94, %s97
      %p106 = scmp.eq.s32.totalorder %s21, 1
      %p107 = por %p105, %p106
      %p108 = scmp.ne.s32.totalorder %s97, %s98
      %p109 = scmp.eq.s32.totalorder %s21, 0
      %p110 = por %p108, %p109
      %p111 = scmp.ne.s32.totalorder %s97, %s98
      %p112 = scmp.eq.s32.totalorder %s22, 1
      %p113 = por %p111, %p112
      %p115 = scmp.ne.s32.totalorder %s98, %s114
      %p116 = scmp.eq.s32.totalorder %s22, 0
      %p117 = por %p115, %p116
      %p118 = scmp.le.s32.totalorder 1, %s16
      %p119 = scmp.lt.s32.totalorder %s16, 3
      %p120 = pnand %p118, %p119
      %p121 = pneg %p120
      // Predicated region
      $region9: #{tpu_custom_call.1} parent=5 // pred_check
        _
      $region10: #{tpu_custom_call.1} parent=5 // pred_check_branch
        %123 = sbr.rel (%p120) target = $region12
      $region11: #{tpu_custom_call.1} parent=5 // pred_region
        %s124 = ssub.s32 %s16, 1
        // Predicated region
        $region13: #{tpu_custom_call.1} parent=11 // pred_check
          %p125 = pneg %p63
        $region14: #{tpu_custom_call.1} parent=11 // pred_check_branch
          %127 = sbr.rel (%p125) target = $region16
        $region15: #{tpu_custom_call.1} parent=11 // pred_region
          %129 = vsyncadd [#allocation6], 0
          %s131 = sshll.u32 %s1, 4
          %s132 = int_to_ptr.hbm [resolvable:$true] %s131
          %s133 = sshll.u32 [#allocation5], 4
          %s134 = int_to_ptr.vmem [resolvable:$true] %s133
          %136 = dma.hbm_to_vmem [thread:$0]  %s132, 64, %s134, [#allocation6]
        $region16: #{tpu_custom_call.1} parent=11 // pred_fallthru
          _
        // Predicated region
        $region17: #{tpu_custom_call.1} parent=11 // pred_check
          %p137 = pneg %p84
        $region18: #{tpu_custom_call.1} parent=11 // pred_check_branch
          %139 = sbr.rel (%p137) target = $region20
        $region19: #{tpu_custom_call.1} parent=11 // pred_region
          %141 = vsyncadd [#allocation6], 0
          %s143 = sshll.u32 %s2, 4
          %s144 = int_to_ptr.hbm [resolvable:$true] %s143
          %s145 = sshll.u32 [#allocation7], 4
          %s146 = int_to_ptr.vmem [resolvable:$true] %s145
          %148 = dma.hbm_to_vmem [thread:$0]  %s144, 64, %s146, [#allocation6]
        $region20: #{tpu_custom_call.1} parent=11 // pred_fallthru
          _
      $region12: #{tpu_custom_call.1} parent=5 // pred_fallthru
        _
      %p149 = scmp.lt.s32.totalorder %s16, 2
      // Predicated region
      $region21: #{tpu_custom_call.1} parent=5 // pred_check
        %p150 = pneg %p149
      $region22: #{tpu_custom_call.1} parent=5 // pred_check_branch
        %152 = sbr.rel (%p150) target = $region24
      $region23: #{tpu_custom_call.1} parent=5 // pred_region
        // Predicated region
        $region25: #{tpu_custom_call.1} parent=23 // pred_check
          %p153 = pneg %p36
        $region26: #{tpu_custom_call.1} parent=23 // pred_check_branch
          %155 = sbr.rel (%p153) target = $region28
        $region27: #{tpu_custom_call.1} parent=23 // pred_region
          %s156 = sand.u32 %s26, 1
          %s157 = scalar_lea.sflag [#allocation3], %s156
          %s158 = sand.u32 %s26, 1
          %s159 = smul.addr %s158, 8
          %s160 = scalar_lea.vmem [#allocation2], %s159
          %162 = vsyncadd %s157, 0
          %s163 = smul.addr %s16, 2
          %s164 = smul.addr %s163, 4
          %s165 = scalar_lea.hbm %s0, %s164
          %s167 = sshll.u32 %s165, 4
          %s168 = int_to_ptr.hbm [resolvable:$true] %s167
          %s169 = sshll.u32 %s160, 4
          %s170 = int_to_ptr.vmem [resolvable:$true] %s169
          %172 = dma.hbm_to_vmem [thread:$0]  %s168, 128, %s170, %s157
        $region28: #{tpu_custom_call.1} parent=23 // pred_fallthru
          _
      $region24: #{tpu_custom_call.1} parent=5 // pred_fallthru
        _
      %p173 = scmp.le.s32.totalorder 1, %s16
      %p174 = scmp.lt.s32.totalorder %s16, 3
      %p175 = pnand %p173, %p174
      %p176 = pneg %p175
      // Predicated region
      $region29: #{tpu_custom_call.1} parent=5 // pred_check
        _
      $region30: #{tpu_custom_call.1} parent=5 // pred_check_branch
        %178 = sbr.rel (%p175) target = $region32
      $region31: #{tpu_custom_call.1} parent=5 // pred_region
        %s179 = ssub.s32 %s16, 1
        %s180 = sand.u32 %s29, 1
        %s181 = scalar_lea.sflag [#allocation3], %s180
        %s182 = sand.u32 %s29, 1
        %s183 = smul.addr %s182, 8
        %s184 = scalar_lea.vmem [#allocation2], %s183
        // Predicated region
        $region33: #{tpu_custom_call.1} parent=31 // pred_check
          %p185 = pneg %p42
        $region34: #{tpu_custom_call.1} parent=31 // pred_check_branch
          %187 = sbr.rel (%p185) target = $region36
        $region35: #{tpu_custom_call.1} parent=31 // pred_region
          %189 = dma.done %s181, 128
        $region36: #{tpu_custom_call.1} parent=31 // pred_fallthru
          _
        // Predicated region
        $region37: #{tpu_custom_call.1} parent=31 // pred_check
          %p190 = pneg %p63
        $region38: #{tpu_custom_call.1} parent=31 // pred_check_branch
          %192 = sbr.rel (%p190) target = $region40
        $region39: #{tpu_custom_call.1} parent=31 // pred_region
          %194 = dma.done [#allocation6], 64
        $region40: #{tpu_custom_call.1} parent=31 // pred_fallthru
          _
        // Predicated region
        $region41: #{tpu_custom_call.1} parent=31 // pred_check
          %p195 = pneg %p84
        $region42: #{tpu_custom_call.1} parent=31 // pred_check_branch
          %197 = sbr.rel (%p195) target = $region44
        $region43: #{tpu_custom_call.1} parent=31 // pred_region
          %199 = dma.done [#allocation6], 64
        $region44: #{tpu_custom_call.1} parent=31 // pred_fallthru
          _
        %s200 = sand.u32 %s29, 1
        %s201 = scalar_lea.sflag [#allocation3], %s200
        %s202 = sand.u32 %s29, 1
        %s203 = smul.addr %s202, 8
        %s204 = scalar_lea.vmem [#allocation2], %s203
        %p205 = pneg %p42
        %p206 = pneg %p39
        %p207 = pneg %p63
        %p208 = pneg %p60
        %p209 = pneg %p84
        %p210 = pneg %p81
        %p211 = pneg %p110
        %p212 = pneg %p107
        %s213 = sand.u32 %s97, 1
        %s214 = scalar_lea.sflag [#allocation4], %s213
        %s215 = sand.u32 %s97, 1
        %s216 = smul.addr %s215, 8
        %s217 = scalar_lea.vmem [#allocation8], %s216
        %v218 = vld [vmem:[%s184] sm:$0xff]
        %220 = vst [vmem:[#allocation1] ss:$2 sm:$0xff] %v218
        %v221 = vld.sshfl [vmem:[#allocation1] sm:$0xff pattern:$0x75316420]
        %v222 = vld.sshfl [vmem:[#allocation1 + $0x8] sm:$0xff pattern:$0x75316420]
        %vm225 = vcmask 1043456
        %v226 = vsel %vm225, %v221, 0.0
        %v227 = vsel %vm225, %v222, 0.0
        %v228 = vadd.f32 %v226, %v227
        %229 = vadd.xlane.f32.xlu0 %v228
        %v230 = vpop.xlane.xlu0 %229
        %v231 = vmul.f32 %v230, 0.00390625
        %v232 = vld [vmem:[#allocation5] sm:$0xf]
        %v233 = vmul.f32 %v232, %v231
        %vm234 = vcmask 60416
        %v235 = vsel %vm234, %v233, 0.0
        %v236 = vrot.slane %v235, 4
        %v237 = vadd.f32 %v235, %v236
        %v238 = vrot.slane %v237, 2
        %v239 = vadd.f32 %v237, %v238
        %v240 = vrot.slane %v239, 1
        %v241 = vadd.f32 %v239, %v240
        %v242 = vmul.f32 %v241, 0.5
        %v243 = vmul.f32 %v241, 0.70710677
        %v244 = vmul.f32 %v243, %v243
        %v245 = vmin.f32 16.0, %v244
        %v246 = vmul.f32 %v245, 2.1237322e-06
        %v247 = vadd.f32 %v246, 0.00028619796
        %v248 = vmul.f32 %v245, %v247
        %v249 = vadd.f32 %v248, 0.0036580483
        %v250 = vmul.f32 %v245, %v249
        %v251 = vadd.f32 %v250, 0.05243302
        %v252 = vmul.f32 %v245, %v251
        %v253 = vadd.f32 %v252, 0.18741608
        %v254 = vmul.f32 %v245, %v253
        %v255 = vadd.f32 %v254, 1.1283791
        %v256 = vmul.f32 %v243, %v255
        %v257 = vmul.f32 %v245, 3.8918573e-05
        %v258 = vadd.f32 %v257, 0.001143296
        %v259 = vmul.f32 %v245, %v258
        %v260 = vadd.f32 %v259, 0.014752088
        %v261 = vmul.f32 %v245, %v260
        %v262 = vadd.f32 %v261, 0.112945676
        %v263 = vmul.f32 %v245, %v262
        %v264 = vadd.f32 %v263, 0.4994258
        %v265 = vmul.f32 %v245, %v264
        %v266 = vadd.f32 %v265, 1.0
        %v267 = vrcp.pop %v266
        %v268 = vmul.f32 %v266, %v267
        %v269 = vsub.f32 1.0, %v268
        %v270 = vmul.f32 %v267, %v269
        %v271 = vadd.f32 %v267, %v270
        %vm272 = vweird.f32 %v266
        %vm273 = vweird.f32 %v267
        %vm274 = vmor %vm272, %vm273
        %v275 = vsel %vm274, %v267, %v271
        %v276 = vand.u32 2147483647, %v266
        %vm277 = vcmp.eq.f32.partialorder %v276, 8.507059e+37
        %v278 = vand.u32 %v266, 2147483648
        %v279 = vor.u32 1.1754944e-38, %v278
        %v280 = vsel %vm277, %v279, %v275
        %v281 = vmul.f32 %v256, %v280
        %v282 = vmin.f32 %v281, 1.0
        %v283 = vmax.f32 %v282, -1.0
        %v284 = vadd.f32 %v283, 1.0
        %v285 = vmul.f32 %v242, %v284
        %v286 = vld [vmem:[#allocation7] sm:$0xf]
        %v287 = vmul.f32 %v286, %v285
        %v288 = vsel %vm234, %v287, 0.0
        %289 = vadd.xlane.f32.xlu0 %v288
        %v290 = vpop.xlane.xlu0 %289
        %v291 = vmul.f32 %v290, 0.16666667
        %v292 = vadd.f32 %v291, 0.5
        %v293 = vmax.f32 %v292, 0.0
        %v294 = vmin.f32 %v293, 1.0
        %v297 = vunpack.c.l.s4 839922192
        %v298 = vunpack.c.0.s8 %v297
        %v299 = vperm.slane %v294, %v298
        %v301 = vmul.f32 %v218, %v299
        %302 = vst [vmem:[%s217] sm:$0xff] %v301
        %s303 = sand.u32 %s97, 1
        %s304 = scalar_lea.sflag [#allocation4], %s303
        %s305 = sand.u32 %s97, 1
        %s306 = smul.addr %s305, 8
        %s307 = scalar_lea.vmem [#allocation8], %s306
        // Predicated region
        $region45: #{tpu_custom_call.1} parent=31 // pred_check
          %p308 = pneg %p107
        $region46: #{tpu_custom_call.1} parent=31 // pred_check_branch
          %310 = sbr.rel (%p308) target = $region48
        $region47: #{tpu_custom_call.1} parent=31 // pred_region
          %312 = vsyncadd %s304, 0
          %s313 = smul.addr %s21, 2
          %s314 = smul.addr %s313, 4
          %s315 = scalar_lea.hbm %s3, %s314
          %s317 = sshll.u32 %s307, 4
          %s318 = int_to_ptr.vmem [resolvable:$true] %s317
          %s319 = sshll.u32 %s315, 4
          %s320 = int_to_ptr.hbm [resolvable:$true] %s319
          %322 = dma.vmem_to_hbm [thread:$0]  %s318, 128, %s320, %s304
        $region48: #{tpu_custom_call.1} parent=31 // pred_fallthru
          _
      $region32: #{tpu_custom_call.1} parent=5 // pred_fallthru
        _
      %p323 = scmp.le.s32.totalorder 2, %s16
      // Predicated region
      $region49: #{tpu_custom_call.1} parent=5 // pred_check
        %p324 = pneg %p323
      $region50: #{tpu_custom_call.1} parent=5 // pred_check_branch
        %326 = sbr.rel (%p324) target = $region52
      $region51: #{tpu_custom_call.1} parent=5 // pred_region
        %s327 = ssub.s32 %s16, 2
        // Predicated region
        $region53: #{tpu_custom_call.1} parent=51 // pred_check
          %p328 = pneg %p113
        $region54: #{tpu_custom_call.1} parent=51 // pred_check_branch
          %330 = sbr.rel (%p328) target = $region56
        $region55: #{tpu_custom_call.1} parent=51 // pred_region
          %s331 = sand.u32 %s98, 1
          %s332 = scalar_lea.sflag [#allocation4], %s331
          %s333 = sand.u32 %s98, 1
          %s334 = smul.addr %s333, 8
          %s335 = scalar_lea.vmem [#allocation8], %s334
          %337 = dma.done %s332, 128
        $region56: #{tpu_custom_call.1} parent=51 // pred_fallthru
          _
      $region52: #{tpu_custom_call.1} parent=5 // pred_fallthru
        _
    $region6: #{tpu_custom_call.1} parent=1 // loop_footer
      %s20 = sadd.s32 1, %s16
    $region7: #{tpu_custom_call.1} parent=1 // loop_footer_branch
      %15 = sbr.rel target = $region3
    $region8: #{tpu_custom_call.1} parent=1 // loop_exit
      _
    %338 = vsyncpa [#allocation3], 1
    %s339 = scalar_lea.sflag [#allocation3], 1
    %340 = vsyncpa %s339, 1
    %341 = vsyncpa [#allocation6], 1
    %342 = vsyncpa [#allocation4], 1
    %s343 = scalar_lea.sflag [#allocation4], 1
    %344 = vsyncpa %s343, 1

</llo_original>
